<compile_context>
chip_gen: v5e
topology: v5e:2x2
jax: 0.10.0
libtpu: 0.0.40
codegen_flags: <defaults>
</compile_context>

<pallas_src>
import functools

import numpy as np
import jax
import jax.numpy as jnp
from jax.experimental import pallas as pl
from jax.experimental.pallas import tpu as pltpu

# Deterministic "parameters" exactly as in Sobelxy.__init__ (no checkpoint).
KERNEL_X = np.array([[-1.0, 0.0, 1.0],
                     [-2.0, 0.0, 2.0],
                     [-1.0, 0.0, 1.0]], dtype=np.float32)
KERNEL_Y = np.array([[1.0, 2.0, 1.0],
                     [0.0, 0.0, 0.0],
                     [-1.0, -2.0, -1.0]], dtype=np.float32)

_TILE_BUDGET = 2 * 1024 * 1024  # ~2 MiB of main-input bytes per grid step


def _sobel_kernel(x_ref, top_ref, bot_ref, o_ref, *, halo_h):
    # x_ref  : (B, TH, W)      image rows [j*TH, (j+1)*TH)
    # top_ref: (B, halo_h, W)  block whose LAST row is image row j*TH - 1
    # bot_ref: (B, halo_h, W)  block whose FIRST row is image row (j+1)*TH
    # o_ref  : (B, TH, W)
    j = pl.program_id(1)
    nj = pl.num_programs(1)

    x = x_ref[...].astype(jnp.float32)
    top = top_ref[:, halo_h - 1:halo_h, :].astype(jnp.float32)
    bot = bot_ref[:, 0:1, :].astype(jnp.float32)
    # conv2d zero padding at the image top / bottom edges.
    top = jnp.where(j > 0, top, 0.0)
    bot = jnp.where(j < nj - 1, bot, 0.0)

    xe = jnp.concatenate([top, x, bot], axis=1)            # (B, TH+2, W)

    # Separable 3x3: only two lane-shifted operands (left/right neighbor).
    zcol = jnp.zeros_like(xe[:, :, :1])
    xl = jnp.concatenate([zcol, xe[:, :, :-1]], axis=2)    # x[.., j-1], 0 at left edge
    xr = jnp.concatenate([xe[:, :, 1:], zcol], axis=2)     # x[.., j+1], 0 at right edge
    hx = xr - xl                                           # row filter [-1, 0, 1]
    hy = xl + 2.0 * xe + xr                                # row filter [ 1, 2, 1]

    # Row (sublane) direction via static slices of the extended rows.
    sobelx = hx[:, :-2, :] + 2.0 * hx[:, 1:-1, :] + hx[:, 2:, :]   # column [1, 2, 1]
    sobely = hy[:, :-2, :] - hy[:, 2:, :]                          # column [1, 0, -1]

    o_ref[...] = (jnp.abs(sobelx) + jnp.abs(sobely)).astype(o_ref.dtype)


def _choose_tiles(N, H, W, itemsize):
    """Pick (batch block B, row tile TH, halo block height)."""
    if H % 8 == 0:
        halo_h = 8
        th = 8
        # Largest multiple-of-8 divisor of H whose main block fits the budget.
        for cand in range(8, H + 1, 8):
            if H % cand == 0 and cand * W * itemsize <= _TILE_BUDGET:
                th = cand
    else:
        # Non-multiple-of-8 heights: full-height tiles (block == full dim is
        # always a legal BlockSpec, regardless of the (8,128) rule).
        halo_h = H
        th = H

    # Batch several images per grid step so tiny images amortize the ~0.35us
    # per-step overhead ...
    b = max(1, min(N, _TILE_BUDGET // max(th * W * itemsize, 1)))
    while N % b:
        b -= 1
    # ... but keep >= 2 grid steps when possible so both v7x TensorCores work.
    if (H // th) == 1 and N > 1 and b == N:
        b = max(1, N // 2)
        while N % b:
            b -= 1
    return b, th, halo_h


def sobelxy(x):
    """x: (N, 1, H, W) float. Returns |sobel_x| + |sobel_y|, same shape."""
    N, C, H, W = x.shape
    assert C == 1, "Sobelxy uses a (1,1,3,3) weight: input must have 1 channel"
    itemsize = jnp.dtype(x.dtype).itemsize
    x3 = x.reshape(N, H, W)                      # free reshape, lane-dense W

    b, th, halo_h = _choose_tiles(N, H, W, itemsize)
    grid = (N // b, H // th)
    tpb = th // halo_h            # row-tile size measured in halo blocks
    n_halo = H // halo_h          # number of halo blocks along H

    main_spec = pl.BlockSpec((b, th, W), lambda bi, j: (bi, j, 0))
    top_spec = pl.BlockSpec(
        (b, halo_h, W), lambda bi, j: (bi, jnp.maximum(j * tpb - 1, 0), 0))
    bot_spec = pl.BlockSpec(
        (b, halo_h, W),
        lambda bi, j: (bi, jnp.minimum((j + 1) * tpb, n_halo - 1), 0))

    # main-in + out + 2 halos, all double-buffered, plus compute headroom.
    block_bytes = (2 * b * th * W + 2 * b * halo_h * W) * itemsize
    vmem_limit = int(min(64 * 1024 * 1024,
                         max(32 * 1024 * 1024, 12 * block_bytes)))

    out = pl.pallas_call(
        functools.partial(_sobel_kernel, halo_h=halo_h),
        out_shape=jax.ShapeDtypeStruct((N, H, W), x.dtype),
        grid=grid,
        in_specs=[main_spec, top_spec, bot_spec],
        out_specs=pl.BlockSpec((b, th, W), lambda bi, j: (bi, j, 0)),
        compiler_params=pltpu.CompilerParams(
            dimension_semantics=("parallel", "parallel"),
            vmem_limit_bytes=vmem_limit),
    )(x3, x3, x3)
    return out.reshape(N, 1, H, W)


def _reference(x_np):
    """Pure NumPy reference of the PyTorch forward (cross-correlation)."""
    N, C, H, W = x_np.shape
    xp = np.pad(x_np[:, 0], ((0, 0), (1, 1), (1, 1)))
    sx = np.zeros((N, H, W), dtype=np.float32)
    sy = np.zeros((N, H, W), dtype=np.float32)
    for di in range(3):
        for dj in range(3):
            win = xp[:, di:di + H, dj:dj + W]
            sx += KERNEL_X[di, dj] * win
            sy += KERNEL_Y[di, dj] * win
    return (np.abs(sx) + np.abs(sy))[:, None, :, :]


if __name__ == "__main__":
    key = jax.random.PRNGKey(0)
    N, C, H, W = 2, 1, 16, 16
    x = jax.random.normal(key, (N, C, H, W), dtype=jnp.float32)

    y = jax.block_until_ready(sobelxy(x))

    y_ref = _reference(np.asarray(x))
    np.testing.assert_allclose(np.asarray(y), y_ref, rtol=1e-5, atol=1e-5)
    print("KERNEL_OK")
</pallas_src>

<mosaic_0001>
module attributes {stable_mosaic.version = 11 : i64} {
  func.func @_sobel_kernel(%arg0: i32, %arg1: i32, %arg2: memref<1x16x16xf32, #tpu.memory_space<vmem>>, %arg3: memref<1x8x16xf32, #tpu.memory_space<vmem>>, %arg4: memref<1x8x16xf32, #tpu.memory_space<vmem>>, %arg5: memref<1x16x16xf32, #tpu.memory_space<vmem>>) attributes {dimension_semantics = [#tpu.dimension_semantics<parallel>, #tpu.dimension_semantics<parallel>], iteration_bounds = array<i64: 2, 1>, scalar_prefetch = 0 : i64, scratch_operands = 0 : i64, tpu.core_type = #tpu.core_type<tc>, window_params = [{transform_indices = @transform_0, window_bounds = array<i64: 1, 16, 16>}, {transform_indices = @transform_1, window_bounds = array<i64: 1, 8, 16>}, {transform_indices = @transform_2, window_bounds = array<i64: 1, 8, 16>}, {transform_indices = @transform_3, window_bounds = array<i64: 1, 16, 16>}]} {
    %c0 = arith.constant 0 : index
    %c0_0 = arith.constant 0 : index
    %c0_1 = arith.constant 0 : index
    %0 = vector.load %arg2[%c0, %c0_0, %c0_1] : memref<1x16x16xf32, #tpu.memory_space<vmem>>, vector<1x16x16xf32>
    %c0_2 = arith.constant 0 : index
    %c7 = arith.constant 7 : index
    %c0_3 = arith.constant 0 : index
    %1 = vector.load %arg3[%c0_2, %c7, %c0_3] : memref<1x8x16xf32, #tpu.memory_space<vmem>>, vector<1x1x16xf32>
    %c0_4 = arith.constant 0 : index
    %c0_5 = arith.constant 0 : index
    %c0_6 = arith.constant 0 : index
    %2 = vector.load %arg4[%c0_4, %c0_5, %c0_6] : memref<1x8x16xf32, #tpu.memory_space<vmem>>, vector<1x1x16xf32>
    %c0_i32 = arith.constant 0 : i32
    %3 = arith.cmpi sgt, %arg1, %c0_i32 : i32
    %cst = arith.constant 0.000000e+00 : f32
    %4 = vector.broadcast %cst : f32 to vector<1x1x16xf32>
    %5 = arith.select %3, %1, %4 : vector<1x1x16xf32>
    %c0_i32_7 = arith.constant 0 : i32
    %6 = arith.cmpi slt, %arg1, %c0_i32_7 : i32
    %cst_8 = arith.constant 0.000000e+00 : f32
    %7 = vector.broadcast %cst_8 : f32 to vector<1x1x16xf32>
    %8 = arith.select %6, %2, %7 : vector<1x1x16xf32>
    %9 = tpu.concatenate %5, %0, %8 in 1 : vector<1x1x16xf32>, vector<1x16x16xf32>, vector<1x1x16xf32> -> vector<1x18x16xf32>
    %cst_9 = arith.constant 0.000000e+00 : f32
    %10 = vector.broadcast %cst_9 : f32 to vector<1x18x1xf32>
    %11 = vector.extract_strided_slice %9 {offsets = [0, 0, 0], sizes = [1, 18, 15], strides = [1, 1, 1]} : vector<1x18x16xf32> to vector<1x18x15xf32>
    %12 = tpu.concatenate %10, %11 in 2 : vector<1x18x1xf32>, vector<1x18x15xf32> -> vector<1x18x16xf32>
    %13 = vector.extract_strided_slice %9 {offsets = [0, 0, 1], sizes = [1, 18, 15], strides = [1, 1, 1]} : vector<1x18x16xf32> to vector<1x18x15xf32>
    %14 = tpu.concatenate %13, %10 in 2 : vector<1x18x15xf32>, vector<1x18x1xf32> -> vector<1x18x16xf32>
    %15 = arith.subf %14, %12 : vector<1x18x16xf32>
    %cst_10 = arith.constant 2.000000e+00 : f32
    %16 = vector.broadcast %cst_10 : f32 to vector<1x18x16xf32>
    %17 = arith.mulf %16, %9 : vector<1x18x16xf32>
    %18 = arith.addf %12, %17 : vector<1x18x16xf32>
    %19 = arith.addf %18, %14 : vector<1x18x16xf32>
    %20 = vector.extract_strided_slice %15 {offsets = [0, 0, 0], sizes = [1, 16, 16], strides = [1, 1, 1]} : vector<1x18x16xf32> to vector<1x16x16xf32>
    %21 = vector.extract_strided_slice %15 {offsets = [0, 1, 0], sizes = [1, 16, 16], strides = [1, 1, 1]} : vector<1x18x16xf32> to vector<1x16x16xf32>
    %cst_11 = arith.constant 2.000000e+00 : f32
    %22 = vector.broadcast %cst_11 : f32 to vector<1x16x16xf32>
    %23 = arith.mulf %22, %21 : vector<1x16x16xf32>
    %24 = arith.addf %20, %23 : vector<1x16x16xf32>
    %25 = vector.extract_strided_slice %15 {offsets = [0, 2, 0], sizes = [1, 16, 16], strides = [1, 1, 1]} : vector<1x18x16xf32> to vector<1x16x16xf32>
    %26 = arith.addf %24, %25 : vector<1x16x16xf32>
    %27 = vector.extract_strided_slice %19 {offsets = [0, 0, 0], sizes = [1, 16, 16], strides = [1, 1, 1]} : vector<1x18x16xf32> to vector<1x16x16xf32>
    %28 = vector.extract_strided_slice %19 {offsets = [0, 2, 0], sizes = [1, 16, 16], strides = [1, 1, 1]} : vector<1x18x16xf32> to vector<1x16x16xf32>
    %29 = arith.subf %27, %28 : vector<1x16x16xf32>
    %30 = math.absf %26 : vector<1x16x16xf32>
    %31 = math.absf %29 : vector<1x16x16xf32>
    %32 = arith.addf %30, %31 : vector<1x16x16xf32>
    %c0_12 = arith.constant 0 : index
    %c0_13 = arith.constant 0 : index
    %c0_14 = arith.constant 0 : index
    %33 = vector.load %arg5[%c0_12, %c0_13, %c0_14] : memref<1x16x16xf32, #tpu.memory_space<vmem>>, vector<1x16x16xf32>
    tpu.vector_store %arg5[%c0_12, %c0_13, %c0_14], %32 {strides = array<i32>} : memref<1x16x16xf32, #tpu.memory_space<vmem>>, vector<1x16x16xf32>,
    return
  }
  func.func @transform_0(%arg0: i32, %arg1: i32) -> (i32, i32, i32) {
    %c0_i32 = arith.constant 0 : i32
    %c0_i32_0 = arith.constant 0 : i32
    return %arg0, %arg1, %c0_i32 : i32, i32, i32
  }
  func.func @transform_1(%arg0: i32, %arg1: i32) -> (i32, i32, i32) {
    %c2_i32 = arith.constant 2 : i32
    %0 = arith.muli %arg1, %c2_i32 : i32
    %c1_i32 = arith.constant 1 : i32
    %1 = arith.subi %0, %c1_i32 : i32
    %c0_i32 = arith.constant 0 : i32
    %2 = arith.maxsi %1, %c0_i32 : i32
    %c0_i32_0 = arith.constant 0 : i32
    %c0_i32_1 = arith.constant 0 : i32
    return %arg0, %2, %c0_i32_0 : i32, i32, i32
  }
  func.func @transform_2(%arg0: i32, %arg1: i32) -> (i32, i32, i32) {
    %c1_i32 = arith.constant 1 : i32
    %0 = arith.addi %arg1, %c1_i32 : i32
    %c2_i32 = arith.constant 2 : i32
    %1 = arith.muli %0, %c2_i32 : i32
    %c1_i32_0 = arith.constant 1 : i32
    %2 = arith.minsi %1, %c1_i32_0 : i32
    %c0_i32 = arith.constant 0 : i32
    %c0_i32_1 = arith.constant 0 : i32
    return %arg0, %2, %c0_i32 : i32, i32, i32
  }
  func.func @transform_3(%arg0: i32, %arg1: i32) -> (i32, i32, i32) {
    %c0_i32 = arith.constant 0 : i32
    %c0_i32_0 = arith.constant 0 : i32
    return %arg0, %arg1, %c0_i32 : i32, i32, i32
  }
}

</mosaic_0001>

<llo_original>
// kernel: tpu_custom_call.1
$region0: #{tpu_custom_call.1}
  #allocation0 [shape = 'u32[]', space=smem, size = 0x4, offset = 0x4, fixed_abs, tag = 'smem constant byte address 0x4 - core index']
  #allocation1 [shape = 'u32[72,128]{1,0:T(1,128)}', space=vmem, size = 0x9000, scoped, tag = 'internal scratch']
  %s0 = inlined_call_operand.hbm [shape: f32[2,16,16], index: 0, kind: input, shape index: {}]
  %s1 = inlined_call_operand.hbm [shape: f32[2,16,16], index: 1, kind: input, shape index: {}]
  %s2 = inlined_call_operand.hbm [shape: f32[2,16,16], index: 2, kind: input, shape index: {}]
  %s3 = inlined_call_operand.hbm [shape: f32[2,16,16], index: 3, kind: output, shape index: {}]
  %s4 = sld [smem:[#allocation0]]
  $region57: #{tpu_custom_call.1} parent=0
    _
  %s6 = ssub.s32 1, %s4
  %s7 = scalar_select 0, %s6, %s4
  $region1: #{tpu_custom_call.1} parent=0
    #allocation2 [shape = 'u8[16384]{0}', space=vmem, size = 0x4000, scoped, tag = 'input window, operand 0']
    #allocation3 [shape = 's32[2]{0}', space=sflag, size = 0x8, scoped, tag = 'scoped memory for tpu_custom_call.1']
    #allocation4 [shape = 's32[2]{0}', space=sflag, size = 0x8, scoped, tag = 'scoped memory for tpu_custom_call.1']
    #allocation5 [shape = 'u8[8192]{0}', space=vmem, size = 0x2000, scoped, tag = 'input window, operand 1']
    #allocation6 [shape = 's32[2]{0}', space=sflag, size = 0x8, scoped, tag = 'scoped memory for tpu_custom_call.1']
    #allocation7 [shape = 'u8[8192]{0}', space=vmem, size = 0x2000, scoped, tag = 'input window, operand 2']
    #allocation8 [shape = 'u8[16384]{0}', space=vmem, size = 0x4000, scoped, tag = 'output window, operand 0']
    %8 = vsyncpa [#allocation3], 0
    %s9 = scalar_lea.sflag [#allocation3], 1
    %10 = vsyncpa %s9, 0
    %11 = vsyncpa [#allocation6], 0
    %s12 = scalar_lea.sflag [#allocation6], 1
    %13 = vsyncpa %s12, 0
    %14 = vsyncpa [#allocation4], 0
    %s15 = scalar_lea.sflag [#allocation4], 1
    %16 = vsyncpa %s15, 0
    loop: start=0, step=1, limit=4
    $region2: #{tpu_custom_call.1} parent=1 // loop_pre_header
      _
    $region3: #{tpu_custom_call.1} parent=1 // loop_header
      %s18 = sphi 0, %s22
      %p19 = scmp.ge.s32.totalorder %s18, 4
      %s25 = sphi 0, %s37
      %s26 = sphi 0, %s33
      %s27 = sphi 0, %s25
      %s28 = sphi 0, %s26
      %s29 = sphi 0, %s27
      %s30 = sphi 0, %s28
      %s42 = sphi 0, %s44
      %s45 = sphi 0, %s42
      %s46 = sphi 0, %s45
      %s62 = sphi 0, %s46
      %s78 = sphi 0, %s80
      %s81 = sphi 0, %s78
      %s82 = sphi 0, %s81
      %s98 = sphi 0, %s82
      %s114 = sphi 0, %s116
      %s117 = sphi 0, %s114
      %s118 = sphi 0, %s117
      %s134 = sphi 0, %s118
      %s142 = sphi 0, %s144
      %s145 = sphi 0, %s142
      %s146 = sphi 0, %s145
      %s162 = sphi 0, %s146
    $region4: #{tpu_custom_call.1} parent=1 // loop_header_branch
      %21 = sbr.rel (%p19) target = $region8
    $region5: #{tpu_custom_call.1} parent=1 // loop_body
      %s23 = ssub.s32 %s18, 1
      %s24 = ssub.s32 %s18, 2
      %s31 = sadd.s32 1, %s26
      %p32 = scmp.ge.s32.totalorder %s31, 1
      %s33 = scalar_select %p32, 0, %s31
      %s34 = sadd.s32 1, %s25
      %s35 = scalar_select %p32, %s34, %s25
      %p36 = scmp.ge.s32.totalorder %s35, 2
      %s37 = scalar_select %p36, 0, %s35
      %s38 = ssub.s32 %s25, %s37
      %s39 = ssub.s32 %s26, %s33
      %s40 = sor.u32 %s38, %s39
      %p41 = scmp.eq.s32.totalorder %s40, 0
      %s43 = sadd.s32 %s42, 1
      %s44 = scalar_select %p41, %s42, %s43
      %p47 = pneg %p41
      %p48 = scmp.eq.s32.totalorder %s18, 1
      %p49 = por %p47, %p48
      %p50 = scmp.ne.s32.totalorder %s42, %s45
      %p51 = scmp.eq.s32.totalorder %s18, 0
      %p52 = por %p50, %p51
      %p53 = scmp.ne.s32.totalorder %s42, %s45
      %p54 = scmp.eq.s32.totalorder %s23, 1
      %p55 = por %p53, %p54
      %p56 = scmp.ne.s32.totalorder %s45, %s46
      %p57 = scmp.eq.s32.totalorder %s23, 0
      %p58 = por %p56, %p57
      %p59 = scmp.ne.s32.totalorder %s45, %s46
      %p60 = scmp.eq.s32.totalorder %s24, 1
      %p61 = por %p59, %p60
      %p63 = scmp.ne.s32.totalorder %s46, %s62
      %p64 = scmp.eq.s32.totalorder %s24, 0
      %p65 = por %p63, %p64
      %s66 = smul.u32 %s26, 2
      %s67 = ssub.s32 %s66, 1
      %p68 = scmp.gt.s32.totalorder %s67, 0
      %s69 = scalar_select %p68, %s67, 0
      %s70 = smul.u32 %s33, 2
      %s71 = ssub.s32 %s70, 1
      %p72 = scmp.gt.s32.totalorder %s71, 0
      %s73 = scalar_select %p72, %s71, 0
      %s74 = ssub.s32 %s25, %s37
      %s75 = ssub.s32 %s69, %s73
      %s76 = sor.u32 %s74, %s75
      %p77 = scmp.eq.s32.totalorder %s76, 0
      %s79 = sadd.s32 %s78, 1
      %s80 = scalar_select %p77, %s78, %s79
      %p83 = pneg %p77
      %p84 = scmp.eq.s32.totalorder %s18, 1
      %p85 = por %p83, %p84
      %p86 = scmp.ne.s32.totalorder %s78, %s81
      %p87 = scmp.eq.s32.totalorder %s18, 0
      %p88 = por %p86, %p87
      %p89 = scmp.ne.s32.totalorder %s78, %s81
      %p90 = scmp.eq.s32.totalorder %s23, 1
      %p91 = por %p89, %p90
      %p92 = scmp.ne.s32.totalorder %s81, %s82
      %p93 = scmp.eq.s32.totalorder %s23, 0
      %p94 = por %p92, %p93
      %p95 = scmp.ne.s32.totalorder %s81, %s82
      %p96 = scmp.eq.s32.totalorder %s24, 1
      %p97 = por %p95, %p96
      %p99 = scmp.ne.s32.totalorder %s82, %s98
      %p100 = scmp.eq.s32.totalorder %s24, 0
      %p101 = por %p99, %p100
      %s102 = sadd.s32 %s26, 1
      %s103 = smul.u32 %s102, 2
      %p104 = scmp.lt.s32.totalorder %s103, 1
      %s105 = scalar_select %p104, %s103, 1
      %s106 = sadd.s32 %s33, 1
      %s107 = smul.u32 %s106, 2
      %p108 = scmp.lt.s32.totalorder %s107, 1
      %s109 = scalar_select %p108, %s107, 1
      %s110 = ssub.s32 %s25, %s37
      %s111 = ssub.s32 %s105, %s109
      %s112 = sor.u32 %s110, %s111
      %p113 = scmp.eq.s32.totalorder %s112, 0
      %s115 = sadd.s32 %s114, 1
      %s116 = scalar_select %p113, %s114, %s115
      %p119 = pneg %p113
      %p120 = scmp.eq.s32.totalorder %s18, 1
      %p121 = por %p119, %p120
      %p122 = scmp.ne.s32.totalorder %s114, %s117
      %p123 = scmp.eq.s32.totalorder %s18, 0
      %p124 = por %p122, %p123
      %p125 = scmp.ne.s32.totalorder %s114, %s117
      %p126 = scmp.eq.s32.totalorder %s23, 1
      %p127 = por %p125, %p126
      %p128 = scmp.ne.s32.totalorder %s117, %s118
      %p129 = scmp.eq.s32.totalorder %s23, 0
      %p130 = por %p128, %p129
      %p131 = scmp.ne.s32.totalorder %s117, %s118
      %p132 = scmp.eq.s32.totalorder %s24, 1
      %p133 = por %p131, %p132
      %p135 = scmp.ne.s32.totalorder %s118, %s134
      %p136 = scmp.eq.s32.totalorder %s24, 0
      %p137 = por %p135, %p136
      %s138 = ssub.s32 %s25, %s37
      %s139 = ssub.s32 %s26, %s33
      %s140 = sor.u32 %s138, %s139
      %p141 = scmp.eq.s32.totalorder %s140, 0
      %s143 = sadd.s32 %s142, 1
      %s144 = scalar_select %p141, %s142, %s143
      %p147 = pneg %p141
      %p148 = scmp.eq.s32.totalorder %s18, 1
      %p149 = por %p147, %p148
      %p150 = scmp.ne.s32.totalorder %s142, %s145
      %p151 = scmp.eq.s32.totalorder %s18, 0
      %p152 = por %p150, %p151
      %p153 = scmp.ne.s32.totalorder %s142, %s145
      %p154 = scmp.eq.s32.totalorder %s23, 1
      %p155 = por %p153, %p154
      %p156 = scmp.ne.s32.totalorder %s145, %s146
      %p157 = scmp.eq.s32.totalorder %s23, 0
      %p158 = por %p156, %p157
      %p159 = scmp.ne.s32.totalorder %s145, %s146
      %p160 = scmp.eq.s32.totalorder %s24, 1
      %p161 = por %p159, %p160
      %p163 = scmp.ne.s32.totalorder %s146, %s162
      %p164 = scmp.eq.s32.totalorder %s24, 0
      %p165 = por %p163, %p164
      %p166 = scmp.le.s32.totalorder 1, %s18
      %p167 = scmp.lt.s32.totalorder %s18, 3
      %p168 = pnand %p166, %p167
      %p169 = pneg %p168
      // Predicated region
      $region9: #{tpu_custom_call.1} parent=5 // pred_check
        _
      $region10: #{tpu_custom_call.1} parent=5 // pred_check_branch
        %171 = sbr.rel (%p168) target = $region12
      $region11: #{tpu_custom_call.1} parent=5 // pred_region
        %s172 = ssub.s32 %s18, 1
      $region12: #{tpu_custom_call.1} parent=5 // pred_fallthru
        _
      %p173 = scmp.lt.s32.totalorder %s18, 2
      // Predicated region
      $region13: #{tpu_custom_call.1} parent=5 // pred_check
        %p174 = pneg %p173
      $region14: #{tpu_custom_call.1} parent=5 // pred_check_branch
        %176 = sbr.rel (%p174) target = $region16
      $region15: #{tpu_custom_call.1} parent=5 // pred_region
        // Predicated region
        $region17: #{tpu_custom_call.1} parent=15 // pred_check
          %p177 = pneg %p52
        $region18: #{tpu_custom_call.1} parent=15 // pred_check_branch
          %179 = sbr.rel (%p177) target = $region20
        $region19: #{tpu_custom_call.1} parent=15 // pred_region
          %s180 = sand.u32 %s42, 1
          %s181 = scalar_lea.sflag [#allocation3], %s180
          %s182 = sand.u32 %s42, 1
          %s183 = smul.addr %s182, 16
          %s184 = scalar_lea.vmem [#allocation2], %s183
          %s185 = smul.u32 2, %s26
          %187 = vsyncadd %s181, 0
          %s188 = smul.addr %s25, 2
          %s189 = sadd.s32 %s185, %s188
          %s190 = smul.addr %s189, 8
          %s191 = scalar_lea.hbm %s0, %s190
          %s192 = sshll.u32 %s191, 4
          %s193 = int_to_ptr.hbm [resolvable:$true] %s192
          %s194 = sshll.u32 %s184, 4
          %s195 = int_to_ptr.vmem [resolvable:$true] %s194
          %200 = dma.hbm_to_vmem [thread:$0]  %s193, 256, %s195, %s181, 128, 128, 8
        $region20: #{tpu_custom_call.1} parent=15 // pred_fallthru
          _
        // Predicated region
        $region21: #{tpu_custom_call.1} parent=15 // pred_check
          %p201 = pneg %p88
        $region22: #{tpu_custom_call.1} parent=15 // pred_check_branch
          %203 = sbr.rel (%p201) target = $region24
        $region23: #{tpu_custom_call.1} parent=15 // pred_region
          %s204 = sand.u32 %s18, 1
          %s205 = scalar_lea.sflag [#allocation6], %s204
          %s206 = sand.u32 %s78, 1
          %s207 = smul.addr %s206, 8
          %s208 = scalar_lea.vmem [#allocation5], %s207
          %s209 = smul.u32 %s26, 2
          %s210 = ssub.s32 %s209, 1
          %p211 = scmp.gt.s32.totalorder %s210, 0
          %s212 = scalar_select %p211, %s210, 0
          %214 = vsyncadd %s205, 0
          %s215 = smul.addr %s25, 2
          %s216 = sadd.s32 %s212, %s215
          %s217 = smul.addr %s216, 8
          %s218 = scalar_lea.hbm %s1, %s217
          %s220 = sshll.u32 %s218, 4
          %s221 = int_to_ptr.hbm [resolvable:$true] %s220
          %s222 = sshll.u32 %s208, 4
          %s223 = int_to_ptr.vmem [resolvable:$true] %s222
          %225 = dma.hbm_to_vmem [thread:$0]  %s221, 128, %s223, %s205
        $region24: #{tpu_custom_call.1} parent=15 // pred_fallthru
          _
        // Predicated region
        $region25: #{tpu_custom_call.1} parent=15 // pred_check
          %p226 = pneg %p124
        $region26: #{tpu_custom_call.1} parent=15 // pred_check_branch
          %228 = sbr.rel (%p226) target = $region28
        $region27: #{tpu_custom_call.1} parent=15 // pred_region
          %s229 = sand.u32 %s18, 1
          %s230 = scalar_lea.sflag [#allocation6], %s229
          %s231 = sand.u32 %s114, 1
          %s232 = smul.addr %s231, 8
          %s233 = scalar_lea.vmem [#allocation7], %s232
          %s234 = sadd.s32 %s26, 1
          %s235 = smul.u32 %s234, 2
          %p236 = scmp.lt.s32.totalorder %s235, 1
          %s237 = scalar_select %p236, %s235, 1
          %239 = vsyncadd %s230, 0
          %s240 = smul.addr %s25, 2
          %s241 = sadd.s32 %s237, %s240
          %s242 = smul.addr %s241, 8
          %s243 = scalar_lea.hbm %s2, %s242
          %s245 = sshll.u32 %s243, 4
          %s246 = int_to_ptr.hbm [resolvable:$true] %s245
          %s247 = sshll.u32 %s233, 4
          %s248 = int_to_ptr.vmem [resolvable:$true] %s247
          %250 = dma.hbm_to_vmem [thread:$0]  %s246, 128, %s248, %s230
        $region28: #{tpu_custom_call.1} parent=15 // pred_fallthru
          _
      $region16: #{tpu_custom_call.1} parent=5 // pred_fallthru
        _
      %p251 = scmp.le.s32.totalorder 1, %s18
      %p252 = scmp.lt.s32.totalorder %s18, 3
      %p253 = pnand %p251, %p252
      %p254 = pneg %p253
      // Predicated region
      $region29: #{tpu_custom_call.1} parent=5 // pred_check
        _
      $region30: #{tpu_custom_call.1} parent=5 // pred_check_branch
        %256 = sbr.rel (%p253) target = $region32
      $region31: #{tpu_custom_call.1} parent=5 // pred_region
        %s257 = ssub.s32 %s18, 1
        %s258 = sand.u32 %s45, 1
        %s259 = scalar_lea.sflag [#allocation3], %s258
        %s260 = sand.u32 %s45, 1
        %s261 = smul.addr %s260, 16
        %s262 = scalar_lea.vmem [#allocation2], %s261
        // Predicated region
        $region33: #{tpu_custom_call.1} parent=31 // pred_check
          %p263 = pneg %p58
        $region34: #{tpu_custom_call.1} parent=31 // pred_check_branch
          %265 = sbr.rel (%p263) target = $region36
        $region35: #{tpu_custom_call.1} parent=31 // pred_region
          %267 = dma.done %s259, 256
        $region36: #{tpu_custom_call.1} parent=31 // pred_fallthru
          _
        %s268 = sand.u32 %s23, 1
        %s269 = scalar_lea.sflag [#allocation6], %s268
        %s270 = sand.u32 %s81, 1
        %s271 = smul.addr %s270, 8
        %s272 = scalar_lea.vmem [#allocation5], %s271
        // Predicated region
        $region37: #{tpu_custom_call.1} parent=31 // pred_check
          %p273 = pneg %p94
        $region38: #{tpu_custom_call.1} parent=31 // pred_check_branch
          %275 = sbr.rel (%p273) target = $region40
        $region39: #{tpu_custom_call.1} parent=31 // pred_region
          %277 = dma.done %s269, 128
        $region40: #{tpu_custom_call.1} parent=31 // pred_fallthru
          _
        %s278 = sand.u32 %s23, 1
        %s279 = scalar_lea.sflag [#allocation6], %s278
        %s280 = sand.u32 %s117, 1
        %s281 = smul.addr %s280, 8
        %s282 = scalar_lea.vmem [#allocation7], %s281
        // Predicated region
        $region41: #{tpu_custom_call.1} parent=31 // pred_check
          %p283 = pneg %p130
        $region42: #{tpu_custom_call.1} parent=31 // pred_check_branch
          %285 = sbr.rel (%p283) target = $region44
        $region43: #{tpu_custom_call.1} parent=31 // pred_region
          %287 = dma.done %s279, 128
        $region44: #{tpu_custom_call.1} parent=31 // pred_fallthru
          _
        %s288 = sand.u32 %s45, 1
        %s289 = scalar_lea.sflag [#allocation3], %s288
        %s290 = sand.u32 %s45, 1
        %s291 = smul.addr %s290, 16
        %s292 = scalar_lea.vmem [#allocation2], %s291
        %p293 = pneg %p58
        %p294 = pneg %p55
        %s295 = sand.u32 %s23, 1
        %s296 = scalar_lea.sflag [#allocation6], %s295
        %s297 = sand.u32 %s81, 1
        %s298 = smul.addr %s297, 8
        %s299 = scalar_lea.vmem [#allocation5], %s298
        %p300 = pneg %p94
        %p301 = pneg %p91
        %s302 = sand.u32 %s23, 1
        %s303 = scalar_lea.sflag [#allocation6], %s302
        %s304 = sand.u32 %s117, 1
        %s305 = smul.addr %s304, 8
        %s306 = scalar_lea.vmem [#allocation7], %s305
        %p307 = pneg %p130
        %p308 = pneg %p127
        %p309 = pneg %p158
        %p310 = pneg %p155
        %s311 = sand.u32 %s145, 1
        %s312 = scalar_lea.sflag [#allocation4], %s311
        %s313 = sand.u32 %s145, 1
        %s314 = smul.addr %s313, 16
        %s315 = scalar_lea.vmem [#allocation8], %s314
        %s316 = smul.u32 2, %s28
        %s317 = smul.u32 %s28, 2
        %s318 = ssub.s32 %s317, 1
        %p319 = scmp.gt.s32.totalorder %s318, 0
        %s320 = scalar_select %p319, %s318, 0
        %s321 = sadd.s32 %s28, 1
        %s322 = smul.u32 %s321, 2
        %p323 = scmp.lt.s32.totalorder %s322, 1
        %s324 = scalar_select %p323, %s322, 1
        %s325 = smul.u32 2, %s28
        %v326 = vld [vmem:[%s262] sm:$0xff]
        %v327 = vld [vmem:[%s262 + $0x8] sm:$0xff]
        %v328 = vld [vmem:[%s272 + $0x7] sm:$0x1]
        %v329 = vld [vmem:[%s282] sm:$0x1]
        %p330 = scmp.gt.s32.totalorder %s28, 0
        %s331 = scalar_select %p330, 1, 0
        %v332 = vstv %s331
        %vm333 = vcmp.eq.s32.totalorder %v332, 1
        %v334 = vsel %vm333, %v328, 0.0
        %p335 = scmp.lt.s32.totalorder %s28, 0
        %s336 = scalar_select %p335, 1, 0
        %v337 = vstv %s336
        %vm338 = vcmp.eq.s32.totalorder %v337, 1
        %v339 = vsel %vm338, %v329, 0.0
        %vm342 = vcmask 1040384
        %v343 = vrot.slane %v326, 7
        %v344 = vrot.slane %v327, 7
        %v345 = vsel %vm342, %v343, %v344
        %v350 = vrot.slane %v339, 7
        %v352 = vsel %vm342, %v334, %v343
        %v353 = vsel %vm342, %v344, %v350
        %356 = vrot.lane.b32.xlu0 %v352, 1
        %v357 = vpop.permute.xlu0 %356
        %358 = vrot.lane.b32.xlu0 %v345, 1
        %v359 = vpop.permute.xlu0 %358
        %360 = vrot.lane.b32.xlu0 %v353, 1
        %v361 = vpop.permute.xlu0 %360
        %vm365 = vcmask 7168
        %v366 = vsel %vm365, 0.0, %v357
        %v367 = vsel %vm365, 0.0, %v359
        %v368 = vsel %vm365, 0.0, %v361
        %369 = vrot.lane.b32.xlu0 %v352, 127
        %v370 = vpop.permute.xlu0 %369
        %371 = vrot.lane.b32.xlu0 %v345, 127
        %v372 = vpop.permute.xlu0 %371
        %373 = vrot.lane.b32.xlu0 %v353, 127
        %v374 = vpop.permute.xlu0 %373
        %vm378 = vcmask 121856
        %v379 = vsel %vm378, %v370, 0.0
        %v380 = vsel %vm378, %v372, 0.0
        %v381 = vsel %vm378, %v374, 0.0
        %v382 = vsub.f32 %v379, %v366
        %v383 = vsub.f32 %v380, %v367
        %v384 = vsub.f32 %v381, %v368
        %v385 = vmul.f32 %v352, 2.0
        %v386 = vmul.f32 %v345, 2.0
        %v387 = vmul.f32 %v353, 2.0
        %v388 = vadd.f32 %v366, %v385
        %v389 = vadd.f32 %v367, %v386
        %v390 = vadd.f32 %v368, %v387
        %v391 = vadd.f32 %v388, %v379
        %v392 = vadd.f32 %v389, %v380
        %v393 = vadd.f32 %v390, %v381
        %v394 = vmul.f32 %v382, 2.0
        %v395 = vmul.f32 %v383, 2.0
        %v396 = vmul.f32 %v384, 2.0
        %vm400 = vcmask 1046528
        %v401 = vrot.slane %v394, 1
        %v402 = vrot.slane %v395, 1
        %v403 = vsel %vm400, %v401, %v402
        %v404 = vrot.slane %v396, 1
        %v405 = vsel %vm400, %v402, %v404
        %v408 = vadd.f32 %v382, %v403
        %v409 = vadd.f32 %v383, %v405
        %vm413 = vcmask 1045504
        %v414 = vrot.slane %v382, 2
        %v415 = vrot.slane %v383, 2
        %v416 = vsel %vm413, %v414, %v415
        %v417 = vrot.slane %v384, 2
        %v418 = vsel %vm413, %v415, %v417
        %v421 = vadd.f32 %v408, %v416
        %v422 = vadd.f32 %v409, %v418
        %v426 = vrot.slane %v391, 2
        %v427 = vrot.slane %v392, 2
        %v428 = vsel %vm413, %v426, %v427
        %v429 = vrot.slane %v393, 2
        %v430 = vsel %vm413, %v427, %v429
        %v433 = vsub.f32 %v391, %v428
        %v434 = vsub.f32 %v392, %v430
        %v435 = vand.u32 2147483647, %v421
        %v436 = vand.u32 2147483647, %v422
        %v437 = vand.u32 2147483647, %v433
        %v438 = vand.u32 2147483647, %v434
        %v439 = vadd.f32 %v435, %v437
        %v440 = vadd.f32 %v436, %v438
        %vm441 = vcmask 130048
        %442 = vst.msk [vmem:[%s315] sm:$0xff] %vm441, %v439
        %443 = vst.msk [vmem:[%s315 + $0x8] sm:$0xff] %vm441, %v440
        %s444 = sand.u32 %s145, 1
        %s445 = scalar_lea.sflag [#allocation4], %s444
        %s446 = sand.u32 %s145, 1
        %s447 = smul.addr %s446, 16
        %s448 = scalar_lea.vmem [#allocation8], %s447
        // Predicated region
        $region45: #{tpu_custom_call.1} parent=31 // pred_check
          %p449 = pneg %p155
        $region46: #{tpu_custom_call.1} parent=31 // pred_check_branch
          %451 = sbr.rel (%p449) target = $region48
        $region47: #{tpu_custom_call.1} parent=31 // pred_region
          %s452 = smul.u32 2, %s28
          %454 = vsyncadd %s445, 0
          %s455 = smul.addr %s27, 2
          %s456 = sadd.s32 %s452, %s455
          %s457 = smul.addr %s456, 8
          %s458 = scalar_lea.hbm %s3, %s457
          %s459 = sshll.u32 %s448, 4
          %s460 = int_to_ptr.vmem [resolvable:$true] %s459
          %s461 = sshll.u32 %s458, 4
          %s462 = int_to_ptr.hbm [resolvable:$true] %s461
          %467 = dma.vmem_to_hbm [thread:$0]  %s460, 256, %s462, %s445, 128, 128, 8
        $region48: #{tpu_custom_call.1} parent=31 // pred_fallthru
          _
      $region32: #{tpu_custom_call.1} parent=5 // pred_fallthru
        _
      %p468 = scmp.le.s32.totalorder 2, %s18
      // Predicated region
      $region49: #{tpu_custom_call.1} parent=5 // pred_check
        %p469 = pneg %p468
      $region50: #{tpu_custom_call.1} parent=5 // pred_check_branch
        %471 = sbr.rel (%p469) target = $region52
      $region51: #{tpu_custom_call.1} parent=5 // pred_region
        %s472 = ssub.s32 %s18, 2
        // Predicated region
        $region53: #{tpu_custom_call.1} parent=51 // pred_check
          %p473 = pneg %p161
        $region54: #{tpu_custom_call.1} parent=51 // pred_check_branch
          %475 = sbr.rel (%p473) target = $region56
        $region55: #{tpu_custom_call.1} parent=51 // pred_region
          %s476 = sand.u32 %s146, 1
          %s477 = scalar_lea.sflag [#allocation4], %s476
          %s478 = sand.u32 %s146, 1
          %s479 = smul.addr %s478, 16
          %s480 = scalar_lea.vmem [#allocation8], %s479
          %482 = dma.done %s477, 256
        $region56: #{tpu_custom_call.1} parent=51 // pred_fallthru
          _
      $region52: #{tpu_custom_call.1} parent=5 // pred_fallthru
        _
    $region6: #{tpu_custom_call.1} parent=1 // loop_footer
      %s22 = sadd.s32 1, %s18
    $region7: #{tpu_custom_call.1} parent=1 // loop_footer_branch
      %17 = sbr.rel target = $region3
    $region8: #{tpu_custom_call.1} parent=1 // loop_exit
      _
    %483 = vsyncpa [#allocation3], 1
    %s484 = scalar_lea.sflag [#allocation3], 1
    %485 = vsyncpa %s484, 1
    %486 = vsyncpa [#allocation6], 1
    %s487 = scalar_lea.sflag [#allocation6], 1
    %488 = vsyncpa %s487, 1
    %489 = vsyncpa [#allocation4], 1
    %s490 = scalar_lea.sflag [#allocation4], 1
    %491 = vsyncpa %s490, 1

</llo_original>
